<compile_context>
chip_gen: v5e
topology: v5e:2x2
jax: 0.10.0
libtpu: 0.0.40
codegen_flags: <defaults>
</compile_context>

<pallas_src>
import jax
import jax.numpy as jnp
from jax import lax
from jax.experimental import pallas as pl
from jax.experimental.pallas import tpu as pltpu


def _label_embed_kernel(labels_ref, table_ref, out_ref):
    # labels_ref: (tm, 1) int32   table_ref: (V, H)   out_ref: (tm, H)
    tm = labels_ref.shape[0]
    V = table_ref.shape[0]
    labels = labels_ref[...]                                  # (tm, 1)
    col = lax.broadcasted_iota(jnp.int32, (tm, V), 1)         # (tm, V)
    onehot = (col == labels).astype(table_ref.dtype)          # one-hot rows
    acc = jnp.dot(onehot, table_ref[...], preferred_element_type=jnp.float32)
    out_ref[...] = acc.astype(out_ref.dtype)


def label_embedding_lookup(labels, table, *, tm=512):
    """labels: (B,) int, table: (V, H) -> (B, H) embeddings."""
    B = labels.shape[0]
    V, H = table.shape

    # Row tile: multiple of 8 (sublane), capped at the padded batch, large by default.
    b_pad8 = ((B + 7) // 8) * 8
    tm = min(tm, b_pad8)
    grid_m = pl.cdiv(b_pad8, tm)
    b_pad = grid_m * tm

    labels2d = labels.astype(jnp.int32).reshape(B, 1)
    if b_pad != B:
        labels2d = jnp.pad(labels2d, ((0, b_pad - B), (0, 0)))  # pad rows read row 0

    out = pl.pallas_call(
        _label_embed_kernel,
        out_shape=jax.ShapeDtypeStruct((b_pad, H), table.dtype),
        grid_spec=pltpu.PrefetchScalarGridSpec(
            num_scalar_prefetch=0,
            grid=(grid_m,),
            in_specs=[
                pl.BlockSpec((tm, 1), lambda i: (i, 0)),      # labels tile
                pl.BlockSpec((V, H), lambda i: (0, 0)),       # full table, resident
            ],
            out_specs=pl.BlockSpec((tm, H), lambda i: (i, 0)),
        ),
        compiler_params=pltpu.CompilerParams(
            dimension_semantics=("parallel",),
        ),
    )(labels2d, table)

    return out[:B] if b_pad != B else out


def label_embedder_forward(labels, table, *, num_classes, dropout_prob,
                           train, force_drop_ids=None, drop_key=None):
    """Mirror of LabelEmbedder.forward(labels, train, force_drop_ids)."""
    use_dropout = dropout_prob > 0
    if (train and use_dropout) or (force_drop_ids is not None):
        if force_drop_ids is None:
            # TODO(synk): the Bernoulli draw (torch.rand) is wrapper-side jax.random,
            # not in-kernel PRNG; where()+lookup semantics match the module exactly.
            drop_ids = jax.random.uniform(drop_key, (labels.shape[0],)) < dropout_prob
        else:
            drop_ids = force_drop_ids == 1
        labels = jnp.where(drop_ids, num_classes, labels)
    return label_embedding_lookup(labels, table)


if __name__ == "__main__":
    # Module config (small): num_classes=10, hidden_size=32, dropout_prob=0.1, B=8
    num_classes = 10
    hidden_size = 32
    dropout_prob = 0.1
    B = 8

    key = jax.random.PRNGKey(0)
    k_tbl, k_lbl, k_drop = jax.random.split(key, 3)

    V = num_classes + 1  # extra row = CFG "null" class (dropout_prob > 0)
    table = jax.random.normal(k_tbl, (V, hidden_size), jnp.float32) * 0.02
    labels = jax.random.randint(k_lbl, (B,), 0, num_classes, jnp.int32)

    # Eval path (no dropout) — deterministic check vs plain-JAX reference.
    out_eval = label_embedder_forward(labels, table, num_classes=num_classes,
                                      dropout_prob=dropout_prob, train=False)
    out_eval = jax.block_until_ready(out_eval)
    ref_eval = table[labels]
    assert out_eval.shape == (B, hidden_size)
    assert jnp.allclose(out_eval, ref_eval, atol=1e-6, rtol=1e-6)

    # CFG path with explicit force_drop_ids — deterministic check.
    force_drop_ids = jnp.array([1, 0, 1, 0, 0, 1, 0, 0], jnp.int32)
    out_cfg = label_embedder_forward(labels, table, num_classes=num_classes,
                                     dropout_prob=dropout_prob, train=True,
                                     force_drop_ids=force_drop_ids)
    out_cfg = jax.block_until_ready(out_cfg)
    ref_cfg = table[jnp.where(force_drop_ids == 1, num_classes, labels)]
    assert jnp.allclose(out_cfg, ref_cfg, atol=1e-6, rtol=1e-6)

    # Train-time random-drop path (exercised for coverage; stochastic by design).
    out_train = label_embedder_forward(labels, table, num_classes=num_classes,
                                       dropout_prob=dropout_prob, train=True,
                                       drop_key=k_drop)
    jax.block_until_ready(out_train)

    print("KERNEL_OK")
</pallas_src>

<mosaic_0001>
module attributes {stable_mosaic.version = 11 : i64} {
  func.func @_label_embed_kernel(%arg0: i32, %arg1: memref<8x1xi32, #tpu.memory_space<vmem>>, %arg2: memref<11x32xf32, #tpu.memory_space<vmem>>, %arg3: memref<8x32xf32, #tpu.memory_space<vmem>>) attributes {dimension_semantics = [#tpu.dimension_semantics<parallel>], iteration_bounds = array<i64: 1>, scalar_prefetch = 0 : i64, scratch_operands = 0 : i64, tpu.core_type = #tpu.core_type<tc>, window_params = [{transform_indices = @transform_0, window_bounds = array<i64: 8, 1>}, {pipeline_mode = #tpu.pipeline_mode<synchronous>, transform_indices = @transform_1, window_bounds = array<i64: 11, 32>}, {transform_indices = @transform_2, window_bounds = array<i64: 8, 32>}]} {
    %c0 = arith.constant 0 : index
    %c0_0 = arith.constant 0 : index
    %0 = vector.load %arg1[%c0, %c0_0] : memref<8x1xi32, #tpu.memory_space<vmem>>, vector<8x1xi32>
    %1 = tpu.iota {dimensions = array<i32: 1>} : vector<8x11xi32>
    %2 = vector.broadcast %0 : vector<8x1xi32> to vector<8x11xi32>
    %3 = arith.cmpi eq, %1, %2 : vector<8x11xi32>
    %4 = arith.extui %3 : vector<8x11xi1> to vector<8x11xi32>
    %5 = arith.sitofp %4 : vector<8x11xi32> to vector<8x11xf32>
    %c0_1 = arith.constant 0 : index
    %c0_2 = arith.constant 0 : index
    %6 = vector.load %arg2[%c0_1, %c0_2] : memref<11x32xf32, #tpu.memory_space<vmem>>, vector<11x32xf32>
    %cst = arith.constant dense<0.000000e+00> : vector<8x32xf32>
    %7 = tpu.matmul %5, %6, %cst {dimension_numbers = #tpu.dot_dimension_numbers<[1], [0], [0], [1], [0, 0, 1, 1], [], []>} : vector<8x11xf32>, vector<11x32xf32>, vector<8x32xf32> -> vector<8x32xf32>
    %c0_3 = arith.constant 0 : index
    %c0_4 = arith.constant 0 : index
    %8 = vector.load %arg3[%c0_3, %c0_4] : memref<8x32xf32, #tpu.memory_space<vmem>>, vector<8x32xf32>
    tpu.vector_store %arg3[%c0_3, %c0_4], %7 {strides = array<i32>} : memref<8x32xf32, #tpu.memory_space<vmem>>, vector<8x32xf32>,
    return
  }
  func.func @transform_0(%arg0: i32) -> (i32, i32) {
    %c0_i32 = arith.constant 0 : i32
    %c0_i32_0 = arith.constant 0 : i32
    return %arg0, %c0_i32 : i32, i32
  }
  func.func @transform_1(%arg0: i32) -> (i32, i32) {
    %c0_i32 = arith.constant 0 : i32
    %c0_i32_0 = arith.constant 0 : i32
    %c0_i32_1 = arith.constant 0 : i32
    return %c0_i32, %c0_i32_0 : i32, i32
  }
  func.func @transform_2(%arg0: i32) -> (i32, i32) {
    %c0_i32 = arith.constant 0 : i32
    %c0_i32_0 = arith.constant 0 : i32
    return %arg0, %c0_i32 : i32, i32
  }
}

</mosaic_0001>

<llo_original>
// kernel: tpu_custom_call.1
$region0: #{tpu_custom_call.1}
  #allocation0 [shape = 'u32[]', space=smem, size = 0x4, offset = 0x4, fixed_abs, tag = 'smem constant byte address 0x4 - core index']
  #allocation1 [shape = 'u32[72,128]{1,0:T(1,128)}', space=vmem, size = 0x9000, scoped, tag = 'internal scratch']
  %s0 = inlined_call_operand.vmem [shape: s32[8,1], index: 0, kind: input, shape index: {}]
  %s1 = inlined_call_operand.hbm [shape: f32[11,32], index: 1, kind: input, shape index: {}]
  %s2 = inlined_call_operand.hbm [shape: f32[8,32], index: 2, kind: output, shape index: {}]
  %s3 = sld [smem:[#allocation0]]
  $region22: #{tpu_custom_call.1} parent=0
    _
  %s5 = ssub.s32 1, %s3
  %s6 = scalar_select 0, %s5, %s3
  $region1: #{tpu_custom_call.1} parent=0
    #allocation2 [shape = 'u8[8192]{0}', space=vmem, size = 0x2000, scoped, tag = 'input window, operand 1, single buffered']
    #allocation3 [shape = 's32[1]{0}', space=sflag, size = 0x4, scoped, tag = 'scoped memory for tpu_custom_call.1']
    #allocation4 [shape = 's32[1]{0}', space=sflag, size = 0x4, scoped, tag = 'scoped memory for tpu_custom_call.1']
    #allocation5 [shape = 'u8[4096]{0}', space=vmem, size = 0x1000, scoped, tag = 'output window, operand 0, single buffered']
    %7 = vsyncpa [#allocation3], 0
    %8 = vsyncpa [#allocation4], 0
    // Predicated region
    $region2: #{tpu_custom_call.1} parent=1 // pred_check
      _
    $region3: #{tpu_custom_call.1} parent=1 // pred_check_branch
      %10 = sbr.rel (0) target = $region5
    $region4: #{tpu_custom_call.1} parent=1 // pred_region
      _
    $region5: #{tpu_custom_call.1} parent=1 // pred_fallthru
      _
    // Predicated region
    $region6: #{tpu_custom_call.1} parent=1 // pred_check
      _
    $region7: #{tpu_custom_call.1} parent=1 // pred_check_branch
      %12 = sbr.rel (0) target = $region9
    $region8: #{tpu_custom_call.1} parent=1 // pred_region
      %14 = vsyncadd [#allocation3], 0
      %s15 = sshll.u32 %s1, 4
      %s16 = int_to_ptr.hbm [resolvable:$true] %s15
      %s17 = sshll.u32 [#allocation2], 4
      %s18 = int_to_ptr.vmem [resolvable:$true] %s17
      %23 = dma.hbm_to_vmem [thread:$0]  %s16, 256, %s18, [#allocation3], 128, 128, 8
    $region9: #{tpu_custom_call.1} parent=1 // pred_fallthru
      _
    // Predicated region
    $region10: #{tpu_custom_call.1} parent=1 // pred_check
      _
    $region11: #{tpu_custom_call.1} parent=1 // pred_check_branch
      %25 = sbr.rel (0) target = $region13
    $region12: #{tpu_custom_call.1} parent=1 // pred_region
      %27 = dma.done [#allocation3], 256
    $region13: #{tpu_custom_call.1} parent=1 // pred_fallthru
      _
    %v28 = vld [vmem:[%s0] sm:$0xff]
    %v29 = vlaneseq
    %v30 = vand.u32 %v29, 127
    %31 = vset.pattern.permute.xlu0 0
    %32 = vperm.xlu0 %31, %v28
    %v33 = vpop.permute.xlu0 %32
    %vm34 = vcmp.eq.s32.totalorder %v30, %v33
    %v35 = vsel %vm34, 1, 0
    %v36 = vcvt.s32.f32 %v35
    %v37 = vld [vmem:[#allocation2] sm:$0xff]
    %v38 = vld [vmem:[#allocation2 + $0x8] sm:$0x7]
    %vm39 = vcmask 89088
    %v41 = vsel %vm39, %v36, 0
    %vm43 = vcmask 1042432
    %v45 = vsel %vm43, %v38, 0
    %47 = vmatpush.msra.mxu0 0.0
    %48 = vmatpush.msra.mxu0 0.0
    %49 = vmatpush.msra.mxu0 0.0
    %50 = vmatpush.msra.mxu0 0.0
    %51 = vmatpush.msra.mxu0 0.0
    %52 = vmatpush.msra.mxu0 0.0
    %53 = vmatpush.msra.mxu0 0.0
    %54 = vmatpush.msra.mxu0 0.0
    %55 = vmatpush.msra.mxu0 0.0
    %56 = vmatpush.msra.mxu0 0.0
    %57 = vmatpush.msra.mxu0 0.0
    %58 = vmatpush.msra.mxu0 0.0
    %59 = vmatpush.msra.mxu0 0.0
    %60 = vmatpush.msra.mxu0 0.0
    %61 = vmatpush.msra.mxu0 %v45
    %62 = vmatpush.msra.mxu0 %v37
    %63 = vmatmul.f32.gmra.mxu0 %v41
    %v64 = vpop.f32.mrf.mxu0
    %v65 = vadd.f32 0.0, %v64
    %66 = vdwg.mxu0
    %vm67 = vcmask 261120
    %68 = vst.msk [vmem:[#allocation5] sm:$0xff] %vm67, %v65
    // Predicated region
    $region14: #{tpu_custom_call.1} parent=1 // pred_check
      _
    $region15: #{tpu_custom_call.1} parent=1 // pred_check_branch
      %70 = sbr.rel (0) target = $region17
    $region16: #{tpu_custom_call.1} parent=1 // pred_region
      %72 = vsyncadd [#allocation4], 0
      %s74 = sshll.u32 [#allocation5], 4
      %s75 = int_to_ptr.vmem [resolvable:$true] %s74
      %s76 = sshll.u32 %s2, 4
      %s77 = int_to_ptr.hbm [resolvable:$true] %s76
      %79 = dma.vmem_to_hbm [thread:$0]  %s75, 128, %s77, [#allocation4]
    $region17: #{tpu_custom_call.1} parent=1 // pred_fallthru
      _
    // Predicated region
    $region18: #{tpu_custom_call.1} parent=1 // pred_check
      _
    $region19: #{tpu_custom_call.1} parent=1 // pred_check_branch
      %81 = sbr.rel (0) target = $region21
    $region20: #{tpu_custom_call.1} parent=1 // pred_region
      %83 = dma.done [#allocation4], 128
    $region21: #{tpu_custom_call.1} parent=1 // pred_fallthru
      _
    %84 = vsyncpa [#allocation3], 1
    %85 = vsyncpa [#allocation4], 1

</llo_original>
